<compile_context>
chip_gen: v6e
topology: v6e:2x2x1
jax: 0.10.0
libtpu: 0.0.40
codegen_flags: <defaults>
</compile_context>

<pallas_src>
import math

import jax
import jax.numpy as jnp
from jax.experimental import pallas as pl
from jax.experimental.pallas import tpu as pltpu


# ---------------------------------------------------------------------------
# Positional encoding (matches the PyTorch PositionalEncoding buffer).
# ---------------------------------------------------------------------------
def positional_encoding(seq_len: int, d_model: int) -> jnp.ndarray:
    assert d_model % 2 == 0, "positional encoding assumes even d_model"
    position = jnp.arange(seq_len, dtype=jnp.float32)[:, None]                # [S, 1]
    div_term = jnp.exp(
        jnp.arange(0, d_model, 2, dtype=jnp.float32) * (-math.log(10000.0) / d_model)
    )                                                                          # [d/2]
    angles = position * div_term                                               # [S, d/2]
    pe = jnp.zeros((seq_len, d_model), dtype=jnp.float32)
    pe = pe.at[:, 0::2].set(jnp.sin(angles))
    pe = pe.at[:, 1::2].set(jnp.cos(angles))
    return pe


# ---------------------------------------------------------------------------
# Kernel: one (seq-tile, batch-element) block.  Pure streaming: matmul + add.
# ---------------------------------------------------------------------------
def _total_embedding_kernel(x_ref, w_ref, pe_ref, o_ref):
    # x_ref  : VMEM (tile_sp, Fp)   -- packed sequence tile of one batch element
    # w_ref  : VMEM (Fp, Dp)        -- (block-diag) weight, pre-scaled by w0, resident
    # pe_ref : VMEM (tile_sp, Dp)   -- packed pe tile, pre-scaled by w1 (+ bias*w0)
    # o_ref  : VMEM (tile_sp, Dp)
    ve = jnp.dot(x_ref[...], w_ref[...], preferred_element_type=jnp.float32)
    o_ref[...] = (ve + pe_ref[...]).astype(o_ref.dtype)


# ---------------------------------------------------------------------------
# Helpers: packing factor, VMEM-aware tile selection.
# ---------------------------------------------------------------------------
def _round_up(x: int, m: int) -> int:
    return ((x + m - 1) // m) * m


def _pack_factor(d_model: int, F: int) -> int:
    """Smallest k with (k*d_model) % 128 == 0, guarded so the block-diag weight stays tiny."""
    k = 128 // math.gcd(d_model, 128)
    if k > 1 and 2 * (k * F) * (k * d_model) * 4 > (2 << 20):
        return 1  # pathological d_model: accept masked stores instead of a huge weight
    return k


def _tile_vmem_bytes(t: int, Dp: int, Fp: int) -> int:
    # double-buffered x (lane-padded to 128), pe and out tiles, all f32
    return 2 * t * max(Fp, 128) * 4 + 2 * t * Dp * 4 + 2 * t * Dp * 4


def _pick_tile(sp_hint: int, Dp: int, Fp: int,
               budget_bytes: int = 12 << 20, cap: int = 1024) -> int:
    """Largest multiple-of-8 tile <= cap fitting the VMEM budget, minimizing seq padding."""
    sp_hint = max(sp_hint, 1)
    max_t = min(cap, _round_up(sp_hint, 8))
    while max_t > 8 and _tile_vmem_bytes(max_t, Dp, Fp) > budget_bytes:
        max_t -= 8
    best_t, best_len = max_t, _round_up(sp_hint, max_t)
    t = max_t - 8
    while t >= 8:
        padded = _round_up(sp_hint, t)
        if padded < best_len:
            best_t, best_len = t, padded
        t -= 8
    return best_t


# ---------------------------------------------------------------------------
# Wrapper.
# ---------------------------------------------------------------------------
@jax.jit
def total_embedding(x, w_ve, b_ve, w_comb):
    """
    x      : [B, S, F]     float32
    w_ve   : [F, d_model]  value-embedding weight (transposed torch layout)
    b_ve   : [d_model]     value-embedding bias
    w_comb : [1, 2]        linear_embedding_weight.weight
    returns: [B, S, d_model] float32
    """
    B, S, F = x.shape
    d_model = w_ve.shape[1]

    w0 = w_comb[0, 0]
    w1 = w_comb[0, 1]

    # Lane-density packing factor (no-op when d_model % 128 == 0).
    k = _pack_factor(d_model, F)
    Fp = k * F
    Dp = k * d_model

    tile_sp = _pick_tile(-(-S // k), Dp, Fp)
    S_pad = _round_up(S, k * tile_sp)
    Sp = S_pad // k

    # ---- parameter prep (tiny, one-time) ----------------------------------
    # Fold combine weights into W; fold bias into the positional encoding.
    w_eff = (w_ve.astype(jnp.float32) * w0)                                  # [F, d_model]
    pe_eff = (positional_encoding(S_pad, d_model) * w1
              + b_ve.astype(jnp.float32) * w0)                               # [S_pad, d_model]

    if k > 1:
        # Block-diagonal weight so packed rows compute k positions at once.
        w_big = jnp.kron(jnp.eye(k, dtype=jnp.float32), w_eff)              # [Fp, Dp]
    else:
        w_big = w_eff

    x_p = x.astype(jnp.float32)
    if S_pad != S:
        x_p = jnp.pad(x_p, ((0, 0), (0, S_pad - S), (0, 0)))
    x_p = x_p.reshape(B, Sp, Fp)            # row-major reinterpretation
    pe_p = pe_eff.reshape(Sp, Dp)

    # ---- pallas call -------------------------------------------------------
    grid = (Sp // tile_sp, B)   # seq outer (megacore-shards on v7x), batch inner

    out_p = pl.pallas_call(
        _total_embedding_kernel,
        out_shape=jax.ShapeDtypeStruct((B, Sp, Dp), jnp.float32),
        grid_spec=pltpu.PrefetchScalarGridSpec(
            num_scalar_prefetch=0,
            grid=grid,
            in_specs=[
                # x tile: one batch element, one packed seq tile.
                pl.BlockSpec((None, tile_sp, Fp), lambda j, b: (b, j, 0)),
                # Weight: tiny, resident (constant block index).
                pl.BlockSpec((Fp, Dp), lambda j, b: (0, 0)),
                # pe tile: follows seq axis; constant across inner batch axis,
                # so it is re-DMA'd only when j changes (read from HBM once overall).
                pl.BlockSpec((tile_sp, Dp), lambda j, b: (j, 0)),
            ],
            out_specs=pl.BlockSpec((None, tile_sp, Dp), lambda j, b: (b, j, 0)),
        ),
        compiler_params=pltpu.CompilerParams(
            dimension_semantics=("parallel", "parallel"),
            vmem_limit_bytes=32 * 1024 * 1024,
        ),
    )(x_p, w_big, pe_p)

    out = out_p.reshape(B, S_pad, d_model)
    if S_pad != S:
        out = out[:, :S, :]
    return out
    # TODO(synk): emit bf16 output (halves the dominant HBM store stream) if the
    #             downstream consumer tolerates it; kept f32 here for reference parity.


# ---------------------------------------------------------------------------
# Pure-JAX reference (mirrors the PyTorch forward).
# ---------------------------------------------------------------------------
def reference(x, w_ve, b_ve, w_comb):
    B, S, F = x.shape
    d_model = w_ve.shape[1]
    ve = x @ w_ve + b_ve
    pe = positional_encoding(S, d_model)[None, :, :]
    pe = jnp.tile(pe, (B, 1, 1))
    return w_comb[0, 0] * ve + w_comb[0, 1] * pe


if __name__ == "__main__":
    # Small shapes consistent with the module.
    B, S = 2, 8
    d_model = 32
    value_features, time_features = 1, 3
    F = value_features + time_features

    key = jax.random.PRNGKey(0)
    kx, kw, kb, kc = jax.random.split(key, 4)

    x = jax.random.normal(kx, (B, S, F), dtype=jnp.float32)

    # Deterministic parameter init (mimicking nn.Linear uniform init bounds).
    bound = 1.0 / math.sqrt(F)
    w_ve = jax.random.uniform(kw, (F, d_model), minval=-bound, maxval=bound,
                              dtype=jnp.float32)
    b_ve = jax.random.uniform(kb, (d_model,), minval=-bound, maxval=bound,
                              dtype=jnp.float32)

    # Case 1: module init (linear_embedding_weight.weight.data.fill_(1)).
    w_comb = jnp.ones((1, 2), dtype=jnp.float32)
    out = jax.block_until_ready(total_embedding(x, w_ve, b_ve, w_comb))
    ref = reference(x, w_ve, b_ve, w_comb)
    assert out.shape == (B, S, d_model)
    assert jnp.allclose(out, ref, atol=1e-5, rtol=1e-5), "mismatch vs reference (w=1)"

    # Case 2: non-trivial combine weights (exercises the w0/w1/bias folding path).
    w_comb2 = jax.random.normal(kc, (1, 2), dtype=jnp.float32)
    out2 = jax.block_until_ready(total_embedding(x, w_ve, b_ve, w_comb2))
    ref2 = reference(x, w_ve, b_ve, w_comb2)
    assert jnp.allclose(out2, ref2, atol=1e-5, rtol=1e-5), "mismatch vs reference (random w)"

    print("KERNEL_OK")
</pallas_src>

<mosaic_0001>
module attributes {stable_mosaic.version = 11 : i64} {
  func.func @_total_embedding_kernel(%arg0: i32, %arg1: i32, %arg2: memref<1x8x16xf32, #tpu.memory_space<vmem>>, %arg3: memref<16x128xf32, #tpu.memory_space<vmem>>, %arg4: memref<8x128xf32, #tpu.memory_space<vmem>>, %arg5: memref<1x8x128xf32, #tpu.memory_space<vmem>>) attributes {dimension_semantics = [#tpu.dimension_semantics<parallel>, #tpu.dimension_semantics<parallel>], iteration_bounds = array<i64: 1, 2>, scalar_prefetch = 0 : i64, scratch_operands = 0 : i64, tpu.core_type = #tpu.core_type<tc>, window_params = [{transform_indices = @transform_0, window_bounds = array<i64: 1, 8, 16>}, {pipeline_mode = #tpu.pipeline_mode<synchronous>, transform_indices = @transform_1, window_bounds = array<i64: 16, 128>}, {transform_indices = @transform_2, window_bounds = array<i64: 8, 128>}, {transform_indices = @transform_3, window_bounds = array<i64: 1, 8, 128>}]} {
    %c0 = arith.constant 0 : index
    %c0_0 = arith.constant 0 : index
    %c0_1 = arith.constant 0 : index
    %0 = vector.load %arg2[%c0, %c0_0, %c0_1] : memref<1x8x16xf32, #tpu.memory_space<vmem>>, vector<1x8x16xf32>
    %1 = vector.shape_cast %0 : vector<1x8x16xf32> to vector<8x16xf32>
    %c0_2 = arith.constant 0 : index
    %c0_3 = arith.constant 0 : index
    %2 = vector.load %arg3[%c0_2, %c0_3] : memref<16x128xf32, #tpu.memory_space<vmem>>, vector<16x128xf32>
    %cst = arith.constant dense<0.000000e+00> : vector<8x128xf32>
    %3 = tpu.matmul %1, %2, %cst {dimension_numbers = #tpu.dot_dimension_numbers<[1], [0], [0], [1], [0, 0, 1, 1], [], []>} : vector<8x16xf32>, vector<16x128xf32>, vector<8x128xf32> -> vector<8x128xf32>
    %c0_4 = arith.constant 0 : index
    %c0_5 = arith.constant 0 : index
    %4 = vector.load %arg4[%c0_4, %c0_5] : memref<8x128xf32, #tpu.memory_space<vmem>>, vector<8x128xf32>
    %5 = arith.addf %3, %4 : vector<8x128xf32>
    %c0_6 = arith.constant 0 : index
    %c0_7 = arith.constant 0 : index
    %c0_8 = arith.constant 0 : index
    %6 = vector.load %arg5[%c0_6, %c0_7, %c0_8] : memref<1x8x128xf32, #tpu.memory_space<vmem>>, vector<1x8x128xf32>
    %7 = vector.shape_cast %6 : vector<1x8x128xf32> to vector<8x128xf32>
    %8 = vector.shape_cast %5 : vector<8x128xf32> to vector<1x8x128xf32>
    tpu.vector_store %arg5[%c0_6, %c0_7, %c0_8], %8 {strides = array<i32>} : memref<1x8x128xf32, #tpu.memory_space<vmem>>, vector<1x8x128xf32>,
    return
  }
  func.func @transform_0(%arg0: i32, %arg1: i32) -> (i32, i32, i32) {
    %c0_i32 = arith.constant 0 : i32
    %c0_i32_0 = arith.constant 0 : i32
    return %arg1, %arg0, %c0_i32 : i32, i32, i32
  }
  func.func @transform_1(%arg0: i32, %arg1: i32) -> (i32, i32) {
    %c0_i32 = arith.constant 0 : i32
    %c0_i32_0 = arith.constant 0 : i32
    %c0_i32_1 = arith.constant 0 : i32
    return %c0_i32, %c0_i32_0 : i32, i32
  }
  func.func @transform_2(%arg0: i32, %arg1: i32) -> (i32, i32) {
    %c0_i32 = arith.constant 0 : i32
    %c0_i32_0 = arith.constant 0 : i32
    return %arg0, %c0_i32 : i32, i32
  }
  func.func @transform_3(%arg0: i32, %arg1: i32) -> (i32, i32, i32) {
    %c0_i32 = arith.constant 0 : i32
    %c0_i32_0 = arith.constant 0 : i32
    return %arg1, %arg0, %c0_i32 : i32, i32, i32
  }
}

</mosaic_0001>

<llo_original>
// kernel: total_embedding.1
$region0: #{total_embedding.1}
  #allocation0 [shape = 'u32[]', space=smem, size = 0x4, offset = 0x4, fixed_abs, tag = 'smem constant byte address 0x4 - core index']
  #allocation1 [shape = 'u32[144,128]{1,0:T(1,128)}', space=vmem, size = 0x12000, scoped, tag = 'internal scratch']
  %s0 = inlined_call_operand.vmem [shape: f32[2,8,16], index: 0, kind: input, shape index: {}]
  %s1 = inlined_call_operand.vmem [shape: f32[16,128], index: 1, kind: input, shape index: {}]
  %s2 = inlined_call_operand.vmem [shape: f32[8,128], index: 2, kind: input, shape index: {}]
  %s3 = inlined_call_operand.vmem [shape: f32[2,8,128], index: 3, kind: output, shape index: {}]
  %s4 = sld [smem:[#allocation0]]
  $region45: #{total_embedding.1} parent=0
    _
  %s6 = ssub.s32 1, %s4
  %s7 = scalar_select 0, %s6, %s4
  loop: start=0, step=1, limit=4
  $region2: #{total_embedding.1} parent=0 // loop_pre_header
    _
  $region3: #{total_embedding.1} parent=0 // loop_header
    %s9 = sphi 0, %s13
    %p10 = scmp.ge.s32.totalorder %s9, 4
    %s16 = sphi 0, %s28
    %s17 = sphi 0, %s24
    %s18 = sphi 0, %s16
    %s19 = sphi 0, %s17
    %s20 = sphi 0, %s18
    %s21 = sphi 0, %s19
    %s33 = sphi 0, %s35
    %s36 = sphi 0, %s33
    %s37 = sphi 0, %s36
    %s53 = sphi 0, %s37
    %s57 = sphi 0, %s57
    %s59 = sphi 0, %s57
    %s60 = sphi 0, %s59
    %s74 = sphi 0, %s60
    %s80 = sphi 0, %s82
    %s83 = sphi 0, %s80
    %s84 = sphi 0, %s83
    %s100 = sphi 0, %s84
    %s108 = sphi 0, %s110
    %s111 = sphi 0, %s108
    %s112 = sphi 0, %s111
    %s128 = sphi 0, %s112
  $region4: #{total_embedding.1} parent=0 // loop_header_branch
    %12 = sbr.rel (%p10) target = $region8
  $region5: #{total_embedding.1} parent=0 // loop_body
    %s14 = ssub.s32 %s9, 1
    %s15 = ssub.s32 %s9, 2
    %s22 = sadd.s32 1, %s17
    %p23 = scmp.ge.s32.totalorder %s22, 2
    %s24 = scalar_select %p23, 0, %s22
    %s25 = sadd.s32 1, %s16
    %s26 = scalar_select %p23, %s25, %s16
    %p27 = scmp.ge.s32.totalorder %s26, 1
    %s28 = scalar_select %p27, 0, %s26
    %s29 = ssub.s32 %s17, %s24
    %s30 = ssub.s32 %s16, %s28
    %s31 = sor.u32 %s29, %s30
    %p32 = scmp.eq.s32.totalorder %s31, 0
    %s34 = sadd.s32 %s33, 1
    %s35 = scalar_select %p32, %s33, %s34
    %p38 = pneg %p32
    %p39 = scmp.eq.s32.totalorder %s9, 1
    %p40 = por %p38, %p39
    %p41 = scmp.ne.s32.totalorder %s33, %s36
    %p42 = scmp.eq.s32.totalorder %s9, 0
    %p43 = por %p41, %p42
    %p44 = scmp.ne.s32.totalorder %s33, %s36
    %p45 = scmp.eq.s32.totalorder %s14, 1
    %p46 = por %p44, %p45
    %p47 = scmp.ne.s32.totalorder %s36, %s37
    %p48 = scmp.eq.s32.totalorder %s14, 0
    %p49 = por %p47, %p48
    %p50 = scmp.ne.s32.totalorder %s36, %s37
    %p51 = scmp.eq.s32.totalorder %s15, 1
    %p52 = por %p50, %p51
    %p54 = scmp.ne.s32.totalorder %s37, %s53
    %p55 = scmp.eq.s32.totalorder %s15, 0
    %p56 = por %p54, %p55
    %s58 = sadd.s32 %s57, 1
    %p61 = scmp.eq.s32.totalorder %s9, 1
    %p62 = scmp.ne.s32.totalorder %s57, %s59
    %p63 = scmp.eq.s32.totalorder %s9, 0
    %p64 = por %p62, %p63
    %p65 = scmp.ne.s32.totalorder %s57, %s59
    %p66 = scmp.eq.s32.totalorder %s14, 1
    %p67 = por %p65, %p66
    %p68 = scmp.ne.s32.totalorder %s59, %s60
    %p69 = scmp.eq.s32.totalorder %s14, 0
    %p70 = por %p68, %p69
    %p71 = scmp.ne.s32.totalorder %s59, %s60
    %p72 = scmp.eq.s32.totalorder %s15, 1
    %p73 = por %p71, %p72
    %p75 = scmp.ne.s32.totalorder %s60, %s74
    %p76 = scmp.eq.s32.totalorder %s15, 0
    %p77 = por %p75, %p76
    %s78 = ssub.s32 %s16, %s28
    %p79 = scmp.eq.s32.totalorder %s78, 0
    %s81 = sadd.s32 %s80, 1
    %s82 = scalar_select %p79, %s80, %s81
    %p85 = pneg %p79
    %p86 = scmp.eq.s32.totalorder %s9, 1
    %p87 = por %p85, %p86
    %p88 = scmp.ne.s32.totalorder %s80, %s83
    %p89 = scmp.eq.s32.totalorder %s9, 0
    %p90 = por %p88, %p89
    %p91 = scmp.ne.s32.totalorder %s80, %s83
    %p92 = scmp.eq.s32.totalorder %s14, 1
    %p93 = por %p91, %p92
    %p94 = scmp.ne.s32.totalorder %s83, %s84
    %p95 = scmp.eq.s32.totalorder %s14, 0
    %p96 = por %p94, %p95
    %p97 = scmp.ne.s32.totalorder %s83, %s84
    %p98 = scmp.eq.s32.totalorder %s15, 1
    %p99 = por %p97, %p98
    %p101 = scmp.ne.s32.totalorder %s84, %s100
    %p102 = scmp.eq.s32.totalorder %s15, 0
    %p103 = por %p101, %p102
    %s104 = ssub.s32 %s17, %s24
    %s105 = ssub.s32 %s16, %s28
    %s106 = sor.u32 %s104, %s105
    %p107 = scmp.eq.s32.totalorder %s106, 0
    %s109 = sadd.s32 %s108, 1
    %s110 = scalar_select %p107, %s108, %s109
    %p113 = pneg %p107
    %p114 = scmp.eq.s32.totalorder %s9, 1
    %p115 = por %p113, %p114
    %p116 = scmp.ne.s32.totalorder %s108, %s111
    %p117 = scmp.eq.s32.totalorder %s9, 0
    %p118 = por %p116, %p117
    %p119 = scmp.ne.s32.totalorder %s108, %s111
    %p120 = scmp.eq.s32.totalorder %s14, 1
    %p121 = por %p119, %p120
    %p122 = scmp.ne.s32.totalorder %s111, %s112
    %p123 = scmp.eq.s32.totalorder %s14, 0
    %p124 = por %p122, %p123
    %p125 = scmp.ne.s32.totalorder %s111, %s112
    %p126 = scmp.eq.s32.totalorder %s15, 1
    %p127 = por %p125, %p126
    %p129 = scmp.ne.s32.totalorder %s112, %s128
    %p130 = scmp.eq.s32.totalorder %s15, 0
    %p131 = por %p129, %p130
    %p132 = scmp.le.s32.totalorder 1, %s9
    %p133 = scmp.lt.s32.totalorder %s9, 3
    %p134 = pnand %p132, %p133
    %p135 = pneg %p134
    // Predicated region
    $region9: #{total_embedding.1} parent=5 // pred_check
      _
    $region10: #{total_embedding.1} parent=5 // pred_check_branch
      %137 = sbr.rel (%p134) target = $region12
    $region11: #{total_embedding.1} parent=5 // pred_region
      %s138 = ssub.s32 %s9, 1
      // Predicated region
      $region13: #{total_embedding.1} parent=11 // pred_check
        %p139 = pneg %p70
      $region14: #{total_embedding.1} parent=11 // pred_check_branch
        %141 = sbr.rel (%p139) target = $region16
      $region15: #{total_embedding.1} parent=11 // pred_region
        _
      $region16: #{total_embedding.1} parent=11 // pred_fallthru
        _
      // Predicated region
      $region17: #{total_embedding.1} parent=11 // pred_check
        %p142 = pneg %p96
      $region18: #{total_embedding.1} parent=11 // pred_check_branch
        %144 = sbr.rel (%p142) target = $region20
      $region19: #{total_embedding.1} parent=11 // pred_region
        %p145 = scmp.lt.s32.totalorder %s18, 0
        %s146 = scalar_select %p145, %s18, 0
        %s147 = smul.addr %s146, 8
        %s148 = scalar_lea.vmem %s2, %s147
      $region20: #{total_embedding.1} parent=11 // pred_fallthru
        _
    $region12: #{total_embedding.1} parent=5 // pred_fallthru
      _
    %p149 = scmp.lt.s32.totalorder %s9, 2
    // Predicated region
    $region21: #{total_embedding.1} parent=5 // pred_check
      %p150 = pneg %p149
    $region22: #{total_embedding.1} parent=5 // pred_check_branch
      %152 = sbr.rel (%p150) target = $region24
    $region23: #{total_embedding.1} parent=5 // pred_region
      // Predicated region
      $region25: #{total_embedding.1} parent=23 // pred_check
        %p153 = pneg %p43
      $region26: #{total_embedding.1} parent=23 // pred_check_branch
        %155 = sbr.rel (%p153) target = $region28
      $region27: #{total_embedding.1} parent=23 // pred_region
        %p156 = scmp.lt.s32.totalorder %s17, 1
        %s157 = scalar_select %p156, %s17, 1
        %p158 = scmp.lt.s32.totalorder %s16, 0
        %s159 = scalar_select %p158, %s16, 0
        %s160 = sadd.s32 %s159, %s157
        %s161 = smul.addr %s160, 8
        %s162 = scalar_lea.vmem %s0, %s161
      $region28: #{total_embedding.1} parent=23 // pred_fallthru
        _
    $region24: #{total_embedding.1} parent=5 // pred_fallthru
      _
    %p163 = scmp.le.s32.totalorder 1, %s9
    %p164 = scmp.lt.s32.totalorder %s9, 3
    %p165 = pnand %p163, %p164
    %p166 = pneg %p165
    // Predicated region
    $region29: #{total_embedding.1} parent=5 // pred_check
      _
    $region30: #{total_embedding.1} parent=5 // pred_check_branch
      %168 = sbr.rel (%p165) target = $region32
    $region31: #{total_embedding.1} parent=5 // pred_region
      %s169 = ssub.s32 %s9, 1
      %p170 = scmp.lt.s32.totalorder %s19, 1
      %s171 = scalar_select %p170, %s19, 1
      %p172 = scmp.lt.s32.totalorder %s18, 0
      %s173 = scalar_select %p172, %s18, 0
      %s174 = sadd.s32 %s173, %s171
      %s175 = smul.addr %s174, 8
      %s176 = scalar_lea.vmem %s0, %s175
      %p177 = pneg %p49
      %p178 = pneg %p46
      %p179 = pneg %p70
      %p180 = pneg %p67
      %p181 = scmp.lt.s32.totalorder %s18, 0
      %s182 = scalar_select %p181, %s18, 0
      %s183 = smul.addr %s182, 8
      %s184 = scalar_lea.vmem %s2, %s183
      %p185 = pneg %p96
      %p186 = pneg %p93
      %p187 = pneg %p124
      %p188 = pneg %p121
      %p189 = scmp.lt.s32.totalorder %s19, 1
      %s190 = scalar_select %p189, %s19, 1
      %p191 = scmp.lt.s32.totalorder %s18, 0
      %s192 = scalar_select %p191, %s18, 0
      %s193 = sadd.s32 %s192, %s190
      %s194 = smul.addr %s193, 8
      %s195 = scalar_lea.vmem %s3, %s194
      %p196 = scmp.lt.s32.totalorder %s19, 1
      %s197 = scalar_select %p196, %s19, 1
      %p198 = scmp.lt.s32.totalorder %s18, 0
      %s199 = scalar_select %p198, %s18, 0
      %s200 = sadd.s32 %s199, %s197
      %s201 = smul.addr %s200, 8
      %s202 = scalar_lea.vmem %s0, %s201
      %p203 = scmp.lt.s32.totalorder %s18, 0
      %s204 = scalar_select %p203, %s18, 0
      %s205 = smul.addr %s204, 8
      %s206 = scalar_lea.vmem %s2, %s205
      %p207 = scmp.lt.s32.totalorder %s19, 1
      %s208 = scalar_select %p207, %s19, 1
      %p209 = scmp.lt.s32.totalorder %s18, 0
      %s210 = scalar_select %p209, %s18, 0
      %s211 = sadd.s32 %s210, %s208
      %s212 = smul.addr %s211, 8
      %s213 = scalar_lea.vmem %s3, %s212
      %v214 = vld [vmem:[%s202] sm:$0xff]
      %v215 = vld [vmem:[%s1] sm:$0xff]
      %v216 = vld [vmem:[%s1 + $0x8] sm:$0xff]
      %v217 = vld [vmem:[%s206] sm:$0xff]
      %vm218 = vcmask 130048
      %v220 = vsel %vm218, %v214, 0
      %222 = vmatprep.subr.mxu0 0.0
      %223 = vmatpush1.msra.mxu0 0.0
      %224 = vmatprep.subr.mxu0 0.0
      %225 = vmatpush1.msra.mxu0 0.0
      %226 = vmatprep.subr.mxu0 0.0
      %227 = vmatpush1.msra.mxu0 0.0
      %228 = vmatprep.subr.mxu0 0.0
      %229 = vmatpush1.msra.mxu0 0.0
      %230 = vmatprep.subr.mxu0 0.0
      %231 = vmatpush1.msra.mxu0 0.0
      %232 = vmatprep.subr.mxu0 0.0
      %233 = vmatpush1.msra.mxu0 0.0
      %234 = vmatprep.subr.mxu0 0.0
      %235 = vmatpush1.msra.mxu0 0.0
      %236 = vmatprep.subr.mxu0 0.0
      %237 = vmatpush1.msra.mxu0 0.0
      %238 = vmatprep.subr.mxu0 0.0
      %239 = vmatpush1.msra.mxu0 0.0
      %240 = vmatprep.subr.mxu0 0.0
      %241 = vmatpush1.msra.mxu0 0.0
      %242 = vmatprep.subr.mxu0 0.0
      %243 = vmatpush1.msra.mxu0 0.0
      %244 = vmatprep.subr.mxu0 0.0
      %245 = vmatpush1.msra.mxu0 0.0
      %246 = vmatprep.subr.mxu0 0.0
      %247 = vmatpush1.msra.mxu0 0.0
      %248 = vmatprep.subr.mxu0 0.0
      %249 = vmatpush1.msra.mxu0 0.0
      %250 = vmatprep.subr.mxu0 0.0
      %251 = vmatpush1.msra.mxu0 %v216
      %252 = vmatprep.subr.mxu0 0.0
      %253 = vmatpush1.msra.mxu0 %v215
      %254 = vmatprep.subr.mxu0 0.0
      %255 = vmatpush2.msra.mxu0 0.0
      %256 = vmatprep.subr.mxu0 0.0
      %257 = vmatpush2.msra.mxu0 0.0
      %258 = vmatprep.subr.mxu0 0.0
      %259 = vmatpush2.msra.mxu0 0.0
      %260 = vmatprep.subr.mxu0 0.0
      %261 = vmatpush2.msra.mxu0 0.0
      %262 = vmatprep.subr.mxu0 0.0
      %263 = vmatpush2.msra.mxu0 0.0
      %264 = vmatprep.subr.mxu0 0.0
      %265 = vmatpush2.msra.mxu0 0.0
      %266 = vmatprep.subr.mxu0 0.0
      %267 = vmatpush2.msra.mxu0 0.0
      %268 = vmatprep.subr.mxu0 0.0
      %269 = vmatpush2.msra.mxu0 0.0
      %270 = vmatprep.subr.mxu0 0.0
      %271 = vmatpush2.msra.mxu0 0.0
      %272 = vmatprep.subr.mxu0 0.0
      %273 = vmatpush2.msra.mxu0 0.0
      %274 = vmatprep.subr.mxu0 0.0
      %275 = vmatpush2.msra.mxu0 0.0
      %276 = vmatprep.subr.mxu0 0.0
      %277 = vmatpush2.msra.mxu0 0.0
      %278 = vmatprep.subr.mxu0 0.0
      %279 = vmatpush2.msra.mxu0 0.0
      %280 = vmatprep.subr.mxu0 0.0
      %281 = vmatpush2.msra.mxu0 0.0
      %282 = vmatprep.subr.mxu0 0.0
      %283 = vmatpush2.msra.mxu0 0.0
      %284 = vmatprep.subr.mxu0 0.0
      %285 = vmatpush2.msra.mxu0 0.0
      %286 = vmatprep.mubr.f32.mxu0 0.0
      %287 = vmatmul.mubr.f32.gmra.mxu0 %v220
      %v288 = vpop.f32.mrf.mxu0
      %v289 = vadd.f32 %v217, %v288
      %v290 = vpop.f32.mrf.mxu0
      %291 = vdwg.mxu0
      %292 = vst [vmem:[%s213] sm:$0xff] %v289
      %p293 = scmp.lt.s32.totalorder %s19, 1
      %s294 = scalar_select %p293, %s19, 1
      %p295 = scmp.lt.s32.totalorder %s18, 0
      %s296 = scalar_select %p295, %s18, 0
      %s297 = sadd.s32 %s296, %s294
      %s298 = smul.addr %s297, 8
      %s299 = scalar_lea.vmem %s3, %s298
      // Predicated region
      $region33: #{total_embedding.1} parent=31 // pred_check
        %p300 = pneg %p121
      $region34: #{total_embedding.1} parent=31 // pred_check_branch
        %302 = sbr.rel (%p300) target = $region36
      $region35: #{total_embedding.1} parent=31 // pred_region
        _
      $region36: #{total_embedding.1} parent=31 // pred_fallthru
        _
    $region32: #{total_embedding.1} parent=5 // pred_fallthru
      _
    %p303 = scmp.le.s32.totalorder 2, %s9
    // Predicated region
    $region37: #{total_embedding.1} parent=5 // pred_check
      %p304 = pneg %p303
    $region38: #{total_embedding.1} parent=5 // pred_check_branch
      %306 = sbr.rel (%p304) target = $region40
    $region39: #{total_embedding.1} parent=5 // pred_region
      %s307 = ssub.s32 %s9, 2
      // Predicated region
      $region41: #{total_embedding.1} parent=39 // pred_check
        %p308 = pneg %p127
      $region42: #{total_embedding.1} parent=39 // pred_check_branch
        %310 = sbr.rel (%p308) target = $region44
      $region43: #{total_embedding.1} parent=39 // pred_region
        %p311 = scmp.lt.s32.totalorder %s21, 1
        %s312 = scalar_select %p311, %s21, 1
        %p313 = scmp.lt.s32.totalorder %s20, 0
        %s314 = scalar_select %p313, %s20, 0
        %s315 = sadd.s32 %s314, %s312
        %s316 = smul.addr %s315, 8
        %s317 = scalar_lea.vmem %s3, %s316
      $region44: #{total_embedding.1} parent=39 // pred_fallthru
        _
    $region40: #{total_embedding.1} parent=5 // pred_fallthru
      _
  $region6: #{total_embedding.1} parent=0 // loop_footer
    %s13 = sadd.s32 1, %s9
  $region7: #{total_embedding.1} parent=0 // loop_footer_branch
    %8 = sbr.rel target = $region3
  $region8: #{total_embedding.1} parent=0 // loop_exit
    _

</llo_original>
